<compile_context>
chip_gen: v6e
topology: v6e:2x2x1
jax: 0.10.0
libtpu: 0.0.40
codegen_flags: <defaults>
</compile_context>

<pallas_src>
import functools

import jax
import jax.numpy as jnp
from jax.experimental import pallas as pl
from jax.experimental.pallas import tpu as pltpu

LANE = 128


def _round_up(x, m):
    return ((x + m - 1) // m) * m


# ---------------------------------------------------------------------------
# Kernel: one grid step == one RNN time step. Weights resident; hidden carried
# in VMEM scratch across the (sequential / "arbitrary") time axis.
# ---------------------------------------------------------------------------
def _rnn_seq_kernel(
    x_ref,        # (B, I_pad)        per-step input (lane-padded)
    h0_ref,       # (B, H)            initial hidden, resident
    w_in_ref,     # (I_pad + H, H)    fused [W_i2h^T ; zeros ; W], resident
    b_h_ref,      # (1, H)            fc_i2h bias, resident
    w_out_ref,    # (H, O + 1)        fused [W_h2o^T | W_h2v^T], resident
    b_out_ref,    # (1, O + 1)        fused [b_h2o | b_h2v], resident
    out_ref,      # (B, O + 1)        per-step fused output
    h_final_ref,  # (B, H)            final hidden (cache), resident
    h_carry,      # VMEM (B, H) f32   recurrent state scratch
):
    t = pl.program_id(0)

    @pl.when(t == 0)
    def _():
        h_carry[...] = h0_ref[...]

    x = x_ref[...]            # (B, I_pad)
    prev = h_carry[...]       # (B, H)

    # hidden = tanh( [x | prev] @ W_in + b_i2h )   -- single MXU push.
    xp = jnp.concatenate([x, prev], axis=-1)       # aligned lane boundary
    hidden = jnp.tanh(
        jnp.dot(xp, w_in_ref[...], preferred_element_type=jnp.float32)
        + b_h_ref[...]
    )
    h_carry[...] = hidden

    # [a_out | v_out] = hidden @ [W_h2o^T | W_h2v^T] + [b_h2o | b_h2v]
    out_ref[...] = (
        jnp.dot(hidden, w_out_ref[...], preferred_element_type=jnp.float32)
        + b_out_ref[...]
    ).astype(out_ref.dtype)

    @pl.when(t == pl.num_programs(0) - 1)
    def _():
        h_final_ref[...] = hidden.astype(h_final_ref.dtype)


# ---------------------------------------------------------------------------
# Wrappers
# ---------------------------------------------------------------------------
def rnn_forward_sequence(x_seq, h0, packed):
    """Run T RNN steps in one pallas_call.

    x_seq : (T, B, I)   h0 : (B, H)
    Returns (a_seq (T,B,O), v_seq (T,B,1), (h_final (B,H),)).
    """
    T, B, I = x_seq.shape
    H = h0.shape[1]
    Kin = packed["w_in"].shape[0]
    I_pad = Kin - H
    Op1 = packed["w_out"].shape[1]
    O = Op1 - 1

    if I_pad != I:  # lane-pad the input once for the whole sequence
        x_seq = jnp.pad(x_seq, ((0, 0), (0, 0), (0, I_pad - I)))

    flops = T * (2 * B * Kin * H + 2 * B * H * Op1)
    transcendentals = T * B * H
    bytes_accessed = 4 * (
        T * B * I_pad + B * H + Kin * H + H + H * Op1 + Op1
        + T * B * Op1 + B * H
    )

    out_seq, h_final = pl.pallas_call(
        _rnn_seq_kernel,
        out_shape=(
            jax.ShapeDtypeStruct((T, B, Op1), jnp.float32),
            jax.ShapeDtypeStruct((B, H), jnp.float32),
        ),
        grid_spec=pltpu.PrefetchScalarGridSpec(
            num_scalar_prefetch=0,
            grid=(T,),
            in_specs=[
                pl.BlockSpec((None, B, I_pad), lambda t: (t, 0, 0)),  # x_t
                pl.BlockSpec((B, H), lambda t: (0, 0)),               # h0
                pl.BlockSpec((Kin, H), lambda t: (0, 0)),             # w_in
                pl.BlockSpec((1, H), lambda t: (0, 0)),               # b_h
                pl.BlockSpec((H, Op1), lambda t: (0, 0)),             # w_out
                pl.BlockSpec((1, Op1), lambda t: (0, 0)),             # b_out
            ],
            out_specs=(
                pl.BlockSpec((None, B, Op1), lambda t: (t, 0, 0)),    # [a|v]_t
                pl.BlockSpec((B, H), lambda t: (0, 0)),               # h_final
            ),
            scratch_shapes=[pltpu.VMEM((B, H), jnp.float32)],
        ),
        compiler_params=pltpu.CompilerParams(
            dimension_semantics=("arbitrary",),
        ),
        cost_estimate=pl.CostEstimate(
            flops=flops,
            transcendentals=transcendentals,
            bytes_accessed=bytes_accessed,
        ),
    )(x_seq, h0, packed["w_in"], packed["b_h"], packed["w_out"],
      packed["b_out"])

    a_seq = out_seq[..., :O]
    v_seq = out_seq[..., O:]
    return a_seq, v_seq, (h_final,)


def rnn_forward(inputs, cache, packed):
    """Single step, matching NonPlastic_NonModulated_RNN.forward(inputs, cache)."""
    prev = cache[0]
    a_seq, v_seq, (h_final,) = rnn_forward_sequence(inputs[None], prev, packed)
    return a_seq[0], v_seq[0], (h_final,)


# ---------------------------------------------------------------------------
# Parameter init (mirrors the PyTorch module) + packing for the fused kernel.
# ---------------------------------------------------------------------------
def _xavier_normal(key, fan_out, fan_in):
    std = (2.0 / (fan_in + fan_out)) ** 0.5
    return jax.random.normal(key, (fan_out, fan_in), dtype=jnp.float32) * std


def init_params(key, input_size, hidden_size, output_size):
    kW, k_i2h, k_h2o, k_h2v, kb1, kb2, kb3 = jax.random.split(key, 7)
    W = _xavier_normal(kW, hidden_size, hidden_size)
    w_i2h = _xavier_normal(k_i2h, hidden_size, input_size)
    b_i2h = jax.random.uniform(
        kb1, (hidden_size,), jnp.float32,
        -1.0 / input_size ** 0.5, 1.0 / input_size ** 0.5)
    w_h2o = _xavier_normal(k_h2o, output_size, hidden_size)
    b_h2o = jax.random.uniform(
        kb2, (output_size,), jnp.float32,
        -1.0 / hidden_size ** 0.5, 1.0 / hidden_size ** 0.5)
    w_h2v = _xavier_normal(k_h2v, 1, hidden_size)
    b_h2v = jax.random.uniform(
        kb3, (1,), jnp.float32,
        -1.0 / hidden_size ** 0.5, 1.0 / hidden_size ** 0.5)
    return {"W": W, "w_i2h": w_i2h, "b_i2h": b_i2h,
            "w_h2o": w_h2o, "b_h2o": b_h2o, "w_h2v": w_h2v, "b_h2v": b_h2v}


def pack_params(raw):
    """Pre-pack weights for the fused kernel (done once, at init time)."""
    H = raw["W"].shape[0]
    I = raw["w_i2h"].shape[1]
    O = raw["w_h2o"].shape[0]
    I_pad = _round_up(I, LANE)
    # Fused hidden weight: rows [0:I] = W_i2h^T, [I:I_pad] = zeros (lane pad),
    # [I_pad:I_pad+H] = W.   [x_pad | prev] @ w_in == x@W_i2h^T + prev@W.
    w_in = jnp.concatenate(
        [raw["w_i2h"].T,
         jnp.zeros((I_pad - I, H), jnp.float32),
         raw["W"]],
        axis=0)
    b_h = raw["b_i2h"].reshape(1, H)
    # Fused output head: [W_h2o^T | W_h2v^T]  ->  out[..., :O]=a, out[..., O:]=v
    w_out = jnp.concatenate([raw["w_h2o"].T, raw["w_h2v"].T], axis=1)
    b_out = jnp.concatenate([raw["b_h2o"], raw["b_h2v"]]).reshape(1, O + 1)
    return {"w_in": w_in, "b_h": b_h, "w_out": w_out, "b_out": b_out}


# ---------------------------------------------------------------------------
# Pure-JAX reference (mirrors the PyTorch forward, scanned over time).
# ---------------------------------------------------------------------------
def _rnn_step_ref(raw, prev, x):
    hidden = jnp.tanh(x @ raw["w_i2h"].T + raw["b_i2h"] + prev @ raw["W"])
    a = hidden @ raw["w_h2o"].T + raw["b_h2o"]
    v = hidden @ raw["w_h2v"].T + raw["b_h2v"]
    return hidden, (a, v)


def rnn_forward_ref_sequence(x_seq, h0, raw):
    h_final, (a_seq, v_seq) = jax.lax.scan(
        functools.partial(_rnn_step_ref, raw), h0, x_seq)
    return a_seq, v_seq, (h_final,)


if __name__ == "__main__":
    batch_size, input_size, hidden_size, output_size, seq_len = 8, 16, 32, 4, 12

    key = jax.random.PRNGKey(0)
    k_params, k_x, k_h = jax.random.split(key, 3)

    raw = init_params(k_params, input_size, hidden_size, output_size)
    packed = pack_params(raw)

    x_seq = jax.random.normal(k_x, (seq_len, batch_size, input_size),
                              jnp.float32)
    h0 = jax.random.normal(k_h, (batch_size, hidden_size), jnp.float32)

    # Fused-sequence kernel.
    a_seq, v_seq, (h_final,) = rnn_forward_sequence(x_seq, h0, packed)
    jax.block_until_ready((a_seq, v_seq, h_final))

    # Cross-check against the pure-JAX reference.
    a_ref, v_ref, (h_ref,) = rnn_forward_ref_sequence(x_seq, h0, raw)
    assert a_seq.shape == (seq_len, batch_size, output_size)
    assert v_seq.shape == (seq_len, batch_size, 1)
    assert jnp.allclose(a_seq, a_ref, atol=5e-5, rtol=1e-5)
    assert jnp.allclose(v_seq, v_ref, atol=5e-5, rtol=1e-5)
    assert jnp.allclose(h_final, h_ref, atol=5e-5, rtol=1e-5)

    # Single-step API (mirrors the module's forward(inputs, cache)).
    a1, v1, (h1,) = rnn_forward(x_seq[0], (h0,), packed)
    jax.block_until_ready((a1, v1, h1))
    assert jnp.allclose(a1, a_ref[0], atol=5e-5, rtol=1e-5)
    assert jnp.allclose(v1, v_ref[0], atol=5e-5, rtol=1e-5)

    print("KERNEL_OK")
</pallas_src>

<mosaic_0001>
module attributes {stable_mosaic.version = 11 : i64} {
  func.func @_rnn_seq_kernel(%arg0: i32, %arg1: memref<1x8x128xf32, #tpu.memory_space<vmem>>, %arg2: memref<8x32xf32, #tpu.memory_space<vmem>>, %arg3: memref<160x32xf32, #tpu.memory_space<vmem>>, %arg4: memref<1x32xf32, #tpu.memory_space<vmem>>, %arg5: memref<32x5xf32, #tpu.memory_space<vmem>>, %arg6: memref<1x5xf32, #tpu.memory_space<vmem>>, %arg7: memref<1x8x5xf32, #tpu.memory_space<vmem>>, %arg8: memref<8x32xf32, #tpu.memory_space<vmem>>, %arg9: memref<8x32xf32, #tpu.memory_space<vmem>>) attributes {dimension_semantics = [#tpu.dimension_semantics<arbitrary>], iteration_bounds = array<i64: 12>, scalar_prefetch = 0 : i64, scratch_operands = 1 : i64, tpu.core_type = #tpu.core_type<tc>, window_params = [{transform_indices = @transform_0, window_bounds = array<i64: 1, 8, 128>}, {pipeline_mode = #tpu.pipeline_mode<synchronous>, transform_indices = @transform_1, window_bounds = array<i64: 8, 32>}, {pipeline_mode = #tpu.pipeline_mode<synchronous>, transform_indices = @transform_2, window_bounds = array<i64: 160, 32>}, {pipeline_mode = #tpu.pipeline_mode<synchronous>, transform_indices = @transform_3, window_bounds = array<i64: 1, 32>}, {pipeline_mode = #tpu.pipeline_mode<synchronous>, transform_indices = @transform_4, window_bounds = array<i64: 32, 5>}, {pipeline_mode = #tpu.pipeline_mode<synchronous>, transform_indices = @transform_5, window_bounds = array<i64: 1, 5>}, {transform_indices = @transform_6, window_bounds = array<i64: 1, 8, 5>}, {pipeline_mode = #tpu.pipeline_mode<synchronous>, transform_indices = @transform_7, window_bounds = array<i64: 8, 32>}]} {
    %c0_i32 = arith.constant 0 : i32
    %0 = arith.cmpi eq, %arg0, %c0_i32 : i32
    %1 = arith.extui %0 : i1 to i32
    %c0_i32_0 = arith.constant 0 : i32
    %2 = arith.cmpi ne, %1, %c0_i32_0 : i32
    scf.if %2 {
      %c0_20 = arith.constant 0 : index
      %c0_21 = arith.constant 0 : index
      %25 = vector.load %arg2[%c0_20, %c0_21] : memref<8x32xf32, #tpu.memory_space<vmem>>, vector<8x32xf32>
      %c0_22 = arith.constant 0 : index
      %c0_23 = arith.constant 0 : index
      %26 = vector.load %arg9[%c0_22, %c0_23] : memref<8x32xf32, #tpu.memory_space<vmem>>, vector<8x32xf32>
      tpu.vector_store %arg9[%c0_22, %c0_23], %25 {strides = array<i32>} : memref<8x32xf32, #tpu.memory_space<vmem>>, vector<8x32xf32>,
    } else {
    }
    %c0 = arith.constant 0 : index
    %c0_1 = arith.constant 0 : index
    %c0_2 = arith.constant 0 : index
    %3 = vector.load %arg1[%c0, %c0_1, %c0_2] : memref<1x8x128xf32, #tpu.memory_space<vmem>>, vector<1x8x128xf32>
    %4 = vector.shape_cast %3 : vector<1x8x128xf32> to vector<8x128xf32>
    %c0_3 = arith.constant 0 : index
    %c0_4 = arith.constant 0 : index
    %5 = vector.load %arg9[%c0_3, %c0_4] : memref<8x32xf32, #tpu.memory_space<vmem>>, vector<8x32xf32>
    %6 = tpu.concatenate %4, %5 in 1 : vector<8x128xf32>, vector<8x32xf32> -> vector<8x160xf32>
    %c0_5 = arith.constant 0 : index
    %c0_6 = arith.constant 0 : index
    %7 = vector.load %arg3[%c0_5, %c0_6] : memref<160x32xf32, #tpu.memory_space<vmem>>, vector<160x32xf32>
    %cst = arith.constant dense<0.000000e+00> : vector<8x32xf32>
    %8 = tpu.matmul %6, %7, %cst {dimension_numbers = #tpu.dot_dimension_numbers<[1], [0], [0], [1], [0, 0, 1, 1], [], []>} : vector<8x160xf32>, vector<160x32xf32>, vector<8x32xf32> -> vector<8x32xf32>
    %c0_7 = arith.constant 0 : index
    %c0_8 = arith.constant 0 : index
    %9 = vector.load %arg4[%c0_7, %c0_8] : memref<1x32xf32, #tpu.memory_space<vmem>>, vector<1x32xf32>
    %10 = vector.broadcast %9 : vector<1x32xf32> to vector<8x32xf32>
    %11 = arith.addf %8, %10 : vector<8x32xf32>
    %12 = math.tanh %11 : vector<8x32xf32>
    %c0_9 = arith.constant 0 : index
    %c0_10 = arith.constant 0 : index
    %13 = vector.load %arg9[%c0_9, %c0_10] : memref<8x32xf32, #tpu.memory_space<vmem>>, vector<8x32xf32>
    tpu.vector_store %arg9[%c0_9, %c0_10], %12 {strides = array<i32>} : memref<8x32xf32, #tpu.memory_space<vmem>>, vector<8x32xf32>,
    %c0_11 = arith.constant 0 : index
    %c0_12 = arith.constant 0 : index
    %14 = vector.load %arg5[%c0_11, %c0_12] : memref<32x5xf32, #tpu.memory_space<vmem>>, vector<32x5xf32>
    %cst_13 = arith.constant dense<0.000000e+00> : vector<8x5xf32>
    %15 = tpu.matmul %12, %14, %cst_13 {dimension_numbers = #tpu.dot_dimension_numbers<[1], [0], [0], [1], [0, 0, 1, 1], [], []>} : vector<8x32xf32>, vector<32x5xf32>, vector<8x5xf32> -> vector<8x5xf32>
    %c0_14 = arith.constant 0 : index
    %c0_15 = arith.constant 0 : index
    %16 = vector.load %arg6[%c0_14, %c0_15] : memref<1x5xf32, #tpu.memory_space<vmem>>, vector<1x5xf32>
    %17 = vector.broadcast %16 : vector<1x5xf32> to vector<8x5xf32>
    %18 = arith.addf %15, %17 : vector<8x5xf32>
    %c0_16 = arith.constant 0 : index
    %c0_17 = arith.constant 0 : index
    %c0_18 = arith.constant 0 : index
    %19 = vector.load %arg7[%c0_16, %c0_17, %c0_18] : memref<1x8x5xf32, #tpu.memory_space<vmem>>, vector<1x8x5xf32>
    %20 = vector.shape_cast %19 : vector<1x8x5xf32> to vector<8x5xf32>
    %21 = vector.shape_cast %18 : vector<8x5xf32> to vector<1x8x5xf32>
    tpu.vector_store %arg7[%c0_16, %c0_17, %c0_18], %21 {strides = array<i32>} : memref<1x8x5xf32, #tpu.memory_space<vmem>>, vector<1x8x5xf32>,
    %c11_i32 = arith.constant 11 : i32
    %22 = arith.cmpi eq, %arg0, %c11_i32 : i32
    %23 = arith.extui %22 : i1 to i32
    %c0_i32_19 = arith.constant 0 : i32
    %24 = arith.cmpi ne, %23, %c0_i32_19 : i32
    scf.if %24 {
      %c0_20 = arith.constant 0 : index
      %c0_21 = arith.constant 0 : index
      %25 = vector.load %arg8[%c0_20, %c0_21] : memref<8x32xf32, #tpu.memory_space<vmem>>, vector<8x32xf32>
      tpu.vector_store %arg8[%c0_20, %c0_21], %12 {strides = array<i32>} : memref<8x32xf32, #tpu.memory_space<vmem>>, vector<8x32xf32>,
    } else {
    }
    return
  }
  func.func @transform_0(%arg0: i32) -> (i32, i32, i32) {
    %c0_i32 = arith.constant 0 : i32
    %c0_i32_0 = arith.constant 0 : i32
    %c0_i32_1 = arith.constant 0 : i32
    return %arg0, %c0_i32, %c0_i32_0 : i32, i32, i32
  }
  func.func @transform_1(%arg0: i32) -> (i32, i32) {
    %c0_i32 = arith.constant 0 : i32
    %c0_i32_0 = arith.constant 0 : i32
    %c0_i32_1 = arith.constant 0 : i32
    return %c0_i32, %c0_i32_0 : i32, i32
  }
  func.func @transform_2(%arg0: i32) -> (i32, i32) {
    %c0_i32 = arith.constant 0 : i32
    %c0_i32_0 = arith.constant 0 : i32
    %c0_i32_1 = arith.constant 0 : i32
    return %c0_i32, %c0_i32_0 : i32, i32
  }
  func.func @transform_3(%arg0: i32) -> (i32, i32) {
    %c0_i32 = arith.constant 0 : i32
    %c0_i32_0 = arith.constant 0 : i32
    %c0_i32_1 = arith.constant 0 : i32
    return %c0_i32, %c0_i32_0 : i32, i32
  }
  func.func @transform_4(%arg0: i32) -> (i32, i32) {
    %c0_i32 = arith.constant 0 : i32
    %c0_i32_0 = arith.constant 0 : i32
    %c0_i32_1 = arith.constant 0 : i32
    return %c0_i32, %c0_i32_0 : i32, i32
  }
  func.func @transform_5(%arg0: i32) -> (i32, i32) {
    %c0_i32 = arith.constant 0 : i32
    %c0_i32_0 = arith.constant 0 : i32
    %c0_i32_1 = arith.constant 0 : i32
    return %c0_i32, %c0_i32_0 : i32, i32
  }
  func.func @transform_6(%arg0: i32) -> (i32, i32, i32) {
    %c0_i32 = arith.constant 0 : i32
    %c0_i32_0 = arith.constant 0 : i32
    %c0_i32_1 = arith.constant 0 : i32
    return %arg0, %c0_i32, %c0_i32_0 : i32, i32, i32
  }
  func.func @transform_7(%arg0: i32) -> (i32, i32) {
    %c0_i32 = arith.constant 0 : i32
    %c0_i32_0 = arith.constant 0 : i32
    %c0_i32_1 = arith.constant 0 : i32
    return %c0_i32, %c0_i32_0 : i32, i32
  }
}

</mosaic_0001>

<llo_original>
// kernel: tpu_custom_call.1
$region0: #{tpu_custom_call.1}
  #allocation0 [shape = 'u32[]', space=smem, size = 0x4, offset = 0x4, fixed_abs, tag = 'smem constant byte address 0x4 - core index']
  #allocation1 [shape = 'u32[144,128]{1,0:T(1,128)}', space=vmem, size = 0x12000, scoped, tag = 'internal scratch']
  #allocation2 [shape = 'f32[8,32]{1,0:T(8,128)}', space=vmem, size = 0x1000, scoped, tag = 'scratch operand']
  %s0 = inlined_call_operand.vmem [shape: f32[12,8,128], index: 0, kind: input, shape index: {}]
  %s1 = inlined_call_operand.vmem [shape: f32[8,32], index: 1, kind: input, shape index: {}]
  %s2 = inlined_call_operand.vmem [shape: f32[160,32], index: 2, kind: input, shape index: {}]
  %s3 = inlined_call_operand.vmem [shape: f32[1,32], index: 3, kind: input, shape index: {}]
  %s4 = inlined_call_operand.vmem [shape: f32[32,5], index: 4, kind: input, shape index: {}]
  %s5 = inlined_call_operand.vmem [shape: f32[1,5], index: 5, kind: input, shape index: {}]
  %s6 = inlined_call_operand.vmem [shape: f32[12,8,5], index: 6, kind: output, shape index: {0}]
  %s7 = inlined_call_operand.hbm [shape: f32[8,32], index: 7, kind: output, shape index: {1}]
  %8 = xla_tuple %s6, %s7
  %s9 = sld [smem:[#allocation0]]
  $region73: #{tpu_custom_call.1} parent=0
    _
  %s11 = ssub.s32 1, %s9
  %s12 = scalar_select 0, %s11, %s9
  $region1: #{tpu_custom_call.1} parent=0
    #allocation3 [shape = 'u8[4096]{0}', space=vmem, size = 0x1000, scoped, tag = 'output window, operand 1, single buffered']
    #allocation4 [shape = 's32[2]{0}', space=sflag, size = 0x8, scoped, tag = 'scoped memory for tpu_custom_call.1']
    %13 = vsyncpa [#allocation4], 0
    loop: start=0, step=1, limit=14
    $region2: #{tpu_custom_call.1} parent=1 // loop_pre_header
      _
    $region3: #{tpu_custom_call.1} parent=1 // loop_header
      %s15 = sphi 0, %s19
      %p16 = scmp.ge.s32.totalorder %s15, 14
      %s25 = sphi 0, %s27
      %s28 = sphi 0, %s25
      %s29 = sphi 0, %s28
      %s45 = sphi 0, %s29
      %s49 = sphi 0, %s49
      %s51 = sphi 0, %s49
      %s52 = sphi 0, %s51
      %s66 = sphi 0, %s52
      %s70 = sphi 0, %s70
      %s72 = sphi 0, %s70
      %s73 = sphi 0, %s72
      %s87 = sphi 0, %s73
      %s91 = sphi 0, %s91
      %s93 = sphi 0, %s91
      %s94 = sphi 0, %s93
      %s108 = sphi 0, %s94
      %s112 = sphi 0, %s112
      %s114 = sphi 0, %s112
      %s115 = sphi 0, %s114
      %s129 = sphi 0, %s115
      %s133 = sphi 0, %s133
      %s135 = sphi 0, %s133
      %s136 = sphi 0, %s135
      %s150 = sphi 0, %s136
      %s156 = sphi 0, %s158
      %s159 = sphi 0, %s156
      %s160 = sphi 0, %s159
      %s176 = sphi 0, %s160
      %s180 = sphi 0, %s180
      %s182 = sphi 0, %s180
      %s183 = sphi 0, %s182
      %s197 = sphi 0, %s183
    $region4: #{tpu_custom_call.1} parent=1 // loop_header_branch
      %18 = sbr.rel (%p16) target = $region8
    $region5: #{tpu_custom_call.1} parent=1 // loop_body
      %s20 = ssub.s32 %s15, 1
      %s21 = ssub.s32 %s15, 2
      %s22 = sadd.s32 %s15, 1
      %s23 = ssub.s32 %s15, %s22
      %p24 = scmp.eq.s32.totalorder %s23, 0
      %s26 = sadd.s32 %s25, 1
      %s27 = scalar_select %p24, %s25, %s26
      %p30 = pneg %p24
      %p31 = scmp.eq.s32.totalorder %s15, 11
      %p32 = por %p30, %p31
      %p33 = scmp.ne.s32.totalorder %s25, %s28
      %p34 = scmp.eq.s32.totalorder %s15, 0
      %p35 = por %p33, %p34
      %p36 = scmp.ne.s32.totalorder %s25, %s28
      %p37 = scmp.eq.s32.totalorder %s20, 11
      %p38 = por %p36, %p37
      %p39 = scmp.ne.s32.totalorder %s28, %s29
      %p40 = scmp.eq.s32.totalorder %s20, 0
      %p41 = por %p39, %p40
      %p42 = scmp.ne.s32.totalorder %s28, %s29
      %p43 = scmp.eq.s32.totalorder %s21, 11
      %p44 = por %p42, %p43
      %p46 = scmp.ne.s32.totalorder %s29, %s45
      %p47 = scmp.eq.s32.totalorder %s21, 0
      %p48 = por %p46, %p47
      %s50 = sadd.s32 %s49, 1
      %p53 = scmp.eq.s32.totalorder %s15, 11
      %p54 = scmp.ne.s32.totalorder %s49, %s51
      %p55 = scmp.eq.s32.totalorder %s15, 0
      %p56 = por %p54, %p55
      %p57 = scmp.ne.s32.totalorder %s49, %s51
      %p58 = scmp.eq.s32.totalorder %s20, 11
      %p59 = por %p57, %p58
      %p60 = scmp.ne.s32.totalorder %s51, %s52
      %p61 = scmp.eq.s32.totalorder %s20, 0
      %p62 = por %p60, %p61
      %p63 = scmp.ne.s32.totalorder %s51, %s52
      %p64 = scmp.eq.s32.totalorder %s21, 11
      %p65 = por %p63, %p64
      %p67 = scmp.ne.s32.totalorder %s52, %s66
      %p68 = scmp.eq.s32.totalorder %s21, 0
      %p69 = por %p67, %p68
      %s71 = sadd.s32 %s70, 1
      %p74 = scmp.eq.s32.totalorder %s15, 11
      %p75 = scmp.ne.s32.totalorder %s70, %s72
      %p76 = scmp.eq.s32.totalorder %s15, 0
      %p77 = por %p75, %p76
      %p78 = scmp.ne.s32.totalorder %s70, %s72
      %p79 = scmp.eq.s32.totalorder %s20, 11
      %p80 = por %p78, %p79
      %p81 = scmp.ne.s32.totalorder %s72, %s73
      %p82 = scmp.eq.s32.totalorder %s20, 0
      %p83 = por %p81, %p82
      %p84 = scmp.ne.s32.totalorder %s72, %s73
      %p85 = scmp.eq.s32.totalorder %s21, 11
      %p86 = por %p84, %p85
      %p88 = scmp.ne.s32.totalorder %s73, %s87
      %p89 = scmp.eq.s32.totalorder %s21, 0
      %p90 = por %p88, %p89
      %s92 = sadd.s32 %s91, 1
      %p95 = scmp.eq.s32.totalorder %s15, 11
      %p96 = scmp.ne.s32.totalorder %s91, %s93
      %p97 = scmp.eq.s32.totalorder %s15, 0
      %p98 = por %p96, %p97
      %p99 = scmp.ne.s32.totalorder %s91, %s93
      %p100 = scmp.eq.s32.totalorder %s20, 11
      %p101 = por %p99, %p100
      %p102 = scmp.ne.s32.totalorder %s93, %s94
      %p103 = scmp.eq.s32.totalorder %s20, 0
      %p104 = por %p102, %p103
      %p105 = scmp.ne.s32.totalorder %s93, %s94
      %p106 = scmp.eq.s32.totalorder %s21, 11
      %p107 = por %p105, %p106
      %p109 = scmp.ne.s32.totalorder %s94, %s108
      %p110 = scmp.eq.s32.totalorder %s21, 0
      %p111 = por %p109, %p110
      %s113 = sadd.s32 %s112, 1
      %p116 = scmp.eq.s32.totalorder %s15, 11
      %p117 = scmp.ne.s32.totalorder %s112, %s114
      %p118 = scmp.eq.s32.totalorder %s15, 0
      %p119 = por %p117, %p118
      %p120 = scmp.ne.s32.totalorder %s112, %s114
      %p121 = scmp.eq.s32.totalorder %s20, 11
      %p122 = por %p120, %p121
      %p123 = scmp.ne.s32.totalorder %s114, %s115
      %p124 = scmp.eq.s32.totalorder %s20, 0
      %p125 = por %p123, %p124
      %p126 = scmp.ne.s32.totalorder %s114, %s115
      %p127 = scmp.eq.s32.totalorder %s21, 11
      %p128 = por %p126, %p127
      %p130 = scmp.ne.s32.totalorder %s115, %s129
      %p131 = scmp.eq.s32.totalorder %s21, 0
      %p132 = por %p130, %p131
      %s134 = sadd.s32 %s133, 1
      %p137 = scmp.eq.s32.totalorder %s15, 11
      %p138 = scmp.ne.s32.totalorder %s133, %s135
      %p139 = scmp.eq.s32.totalorder %s15, 0
      %p140 = por %p138, %p139
      %p141 = scmp.ne.s32.totalorder %s133, %s135
      %p142 = scmp.eq.s32.totalorder %s20, 11
      %p143 = por %p141, %p142
      %p144 = scmp.ne.s32.totalorder %s135, %s136
      %p145 = scmp.eq.s32.totalorder %s20, 0
      %p146 = por %p144, %p145
      %p147 = scmp.ne.s32.totalorder %s135, %s136
      %p148 = scmp.eq.s32.totalorder %s21, 11
      %p149 = por %p147, %p148
      %p151 = scmp.ne.s32.totalorder %s136, %s150
      %p152 = scmp.eq.s32.totalorder %s21, 0
      %p153 = por %p151, %p152
      %s154 = ssub.s32 %s15, %s22
      %p155 = scmp.eq.s32.totalorder %s154, 0
      %s157 = sadd.s32 %s156, 1
      %s158 = scalar_select %p155, %s156, %s157
      %p161 = pneg %p155
      %p162 = scmp.eq.s32.totalorder %s15, 11
      %p163 = por %p161, %p162
      %p164 = scmp.ne.s32.totalorder %s156, %s159
      %p165 = scmp.eq.s32.totalorder %s15, 0
      %p166 = por %p164, %p165
      %p167 = scmp.ne.s32.totalorder %s156, %s159
      %p168 = scmp.eq.s32.totalorder %s20, 11
      %p169 = por %p167, %p168
      %p170 = scmp.ne.s32.totalorder %s159, %s160
      %p171 = scmp.eq.s32.totalorder %s20, 0
      %p172 = por %p170, %p171
      %p173 = scmp.ne.s32.totalorder %s159, %s160
      %p174 = scmp.eq.s32.totalorder %s21, 11
      %p175 = por %p173, %p174
      %p177 = scmp.ne.s32.totalorder %s160, %s176
      %p178 = scmp.eq.s32.totalorder %s21, 0
      %p179 = por %p177, %p178
      %s181 = sadd.s32 %s180, 1
      %p184 = scmp.eq.s32.totalorder %s15, 11
      %p185 = scmp.ne.s32.totalorder %s180, %s182
      %p186 = scmp.eq.s32.totalorder %s15, 0
      %p187 = por %p185, %p186
      %p188 = scmp.ne.s32.totalorder %s180, %s182
      %p189 = scmp.eq.s32.totalorder %s20, 11
      %p190 = por %p188, %p189
      %p191 = scmp.ne.s32.totalorder %s182, %s183
      %p192 = scmp.eq.s32.totalorder %s20, 0
      %p193 = por %p191, %p192
      %p194 = scmp.ne.s32.totalorder %s182, %s183
      %p195 = scmp.eq.s32.totalorder %s21, 11
      %p196 = por %p194, %p195
      %p198 = scmp.ne.s32.totalorder %s183, %s197
      %p199 = scmp.eq.s32.totalorder %s21, 0
      %p200 = por %p198, %p199
      %p201 = scmp.le.s32.totalorder 1, %s15
      %p202 = scmp.lt.s32.totalorder %s15, 13
      %p203 = pnand %p201, %p202
      %p204 = pneg %p203
      // Predicated region
      $region9: #{tpu_custom_call.1} parent=5 // pred_check
        _
      $region10: #{tpu_custom_call.1} parent=5 // pred_check_branch
        %206 = sbr.rel (%p203) target = $region12
      $region11: #{tpu_custom_call.1} parent=5 // pred_region
        %s207 = ssub.s32 %s15, 1
        // Predicated region
        $region13: #{tpu_custom_call.1} parent=11 // pred_check
          %p208 = pneg %p62
        $region14: #{tpu_custom_call.1} parent=11 // pred_check_branch
          %210 = sbr.rel (%p208) target = $region16
        $region15: #{tpu_custom_call.1} parent=11 // pred_region
          _
        $region16: #{tpu_custom_call.1} parent=11 // pred_fallthru
          _
        // Predicated region
        $region17: #{tpu_custom_call.1} parent=11 // pred_check
          %p211 = pneg %p83
        $region18: #{tpu_custom_call.1} parent=11 // pred_check_branch
          %213 = sbr.rel (%p211) target = $region20
        $region19: #{tpu_custom_call.1} parent=11 // pred_region
          _
        $region20: #{tpu_custom_call.1} parent=11 // pred_fallthru
          _
        // Predicated region
        $region21: #{tpu_custom_call.1} parent=11 // pred_check
          %p214 = pneg %p104
        $region22: #{tpu_custom_call.1} parent=11 // pred_check_branch
          %216 = sbr.rel (%p214) target = $region24
        $region23: #{tpu_custom_call.1} parent=11 // pred_region
          _
        $region24: #{tpu_custom_call.1} parent=11 // pred_fallthru
          _
        // Predicated region
        $region25: #{tpu_custom_call.1} parent=11 // pred_check
          %p217 = pneg %p125
        $region26: #{tpu_custom_call.1} parent=11 // pred_check_branch
          %219 = sbr.rel (%p217) target = $region28
        $region27: #{tpu_custom_call.1} parent=11 // pred_region
          _
        $region28: #{tpu_custom_call.1} parent=11 // pred_fallthru
          _
        // Predicated region
        $region29: #{tpu_custom_call.1} parent=11 // pred_check
          %p220 = pneg %p146
        $region30: #{tpu_custom_call.1} parent=11 // pred_check_branch
          %222 = sbr.rel (%p220) target = $region32
        $region31: #{tpu_custom_call.1} parent=11 // pred_region
          _
        $region32: #{tpu_custom_call.1} parent=11 // pred_fallthru
          _
      $region12: #{tpu_custom_call.1} parent=5 // pred_fallthru
        _
      %p223 = scmp.lt.s32.totalorder %s15, 12
      // Predicated region
      $region33: #{tpu_custom_call.1} parent=5 // pred_check
        %p224 = pneg %p223
      $region34: #{tpu_custom_call.1} parent=5 // pred_check_branch
        %226 = sbr.rel (%p224) target = $region36
      $region35: #{tpu_custom_call.1} parent=5 // pred_region
        // Predicated region
        $region37: #{tpu_custom_call.1} parent=35 // pred_check
          %p227 = pneg %p35
        $region38: #{tpu_custom_call.1} parent=35 // pred_check_branch
          %229 = sbr.rel (%p227) target = $region40
        $region39: #{tpu_custom_call.1} parent=35 // pred_region
          %p230 = scmp.lt.s32.totalorder %s15, 11
          %s231 = scalar_select %p230, %s15, 11
          %s232 = smul.addr %s231, 8
          %s233 = scalar_lea.vmem %s0, %s232
        $region40: #{tpu_custom_call.1} parent=35 // pred_fallthru
          _
      $region36: #{tpu_custom_call.1} parent=5 // pred_fallthru
        _
      %p234 = scmp.le.s32.totalorder 1, %s15
      %p235 = scmp.lt.s32.totalorder %s15, 13
      %p236 = pnand %p234, %p235
      %p237 = pneg %p236
      // Predicated region
      $region41: #{tpu_custom_call.1} parent=5 // pred_check
        _
      $region42: #{tpu_custom_call.1} parent=5 // pred_check_branch
        %239 = sbr.rel (%p236) target = $region44
      $region43: #{tpu_custom_call.1} parent=5 // pred_region
        %s240 = ssub.s32 %s15, 1
        %p241 = scmp.lt.s32.totalorder %s20, 11
        %s242 = scalar_select %p241, %s20, 11
        %s243 = smul.addr %s242, 8
        %s244 = scalar_lea.vmem %s0, %s243
        %p245 = pneg %p41
        %p246 = pneg %p38
        %p247 = pneg %p62
        %p248 = pneg %p59
        %p249 = pneg %p83
        %p250 = pneg %p80
        %p251 = pneg %p104
        %p252 = pneg %p101
        %p253 = pneg %p125
        %p254 = pneg %p122
        %p255 = pneg %p146
        %p256 = pneg %p143
        %p257 = pneg %p172
        %p258 = pneg %p169
        %p259 = scmp.lt.s32.totalorder %s20, 11
        %s260 = scalar_select %p259, %s20, 11
        %s261 = smul.addr %s260, 8
        %s262 = scalar_lea.vmem %s6, %s261
        %p263 = pneg %p193
        %p264 = pneg %p190
        %p265 = scmp.lt.s32.totalorder %s20, 11
        %s266 = scalar_select %p265, %s20, 11
        %s267 = smul.addr %s266, 8
        %s268 = scalar_lea.vmem %s0, %s267
        %p269 = scmp.lt.s32.totalorder %s20, 11
        %s270 = scalar_select %p269, %s20, 11
        %s271 = smul.addr %s270, 8
        %s272 = scalar_lea.vmem %s6, %s271
        %p273 = scmp.eq.s32.totalorder %s20, 0
        // Predicated region
        $region45: #{tpu_custom_call.1} parent=43 // pred_check
          %p274 = pneg %p273
        $region46: #{tpu_custom_call.1} parent=43 // pred_check_branch
          %276 = sbr.rel (%p274) target = $region48
        $region47: #{tpu_custom_call.1} parent=43 // pred_region
          %v277 = vld [vmem:[%s1] sm:$0xff]
          %vm278 = vcmask 261120
          %279 = vst.msk [vmem:[#allocation2] sm:$0xff] %vm278, %v277
        $region48: #{tpu_custom_call.1} parent=43 // pred_fallthru
          _
        %v280 = vld [vmem:[%s268] sm:$0xff]
        %v281 = vld [vmem:[#allocation2] sm:$0xff]
        %v282 = vld [vmem:[%s2] sm:$0xff]
        %v283 = vld [vmem:[%s2 + $0x8] sm:$0xff]
        %v284 = vld [vmem:[%s2 + $0x10] sm:$0xff]
        %v285 = vld [vmem:[%s2 + $0x18] sm:$0xff]
        %v286 = vld [vmem:[%s2 + $0x20] sm:$0xff]
        %v287 = vld [vmem:[%s2 + $0x28] sm:$0xff]
        %v288 = vld [vmem:[%s2 + $0x30] sm:$0xff]
        %v289 = vld [vmem:[%s2 + $0x38] sm:$0xff]
        %v290 = vld [vmem:[%s2 + $0x40] sm:$0xff]
        %v291 = vld [vmem:[%s2 + $0x48] sm:$0xff]
        %v292 = vld [vmem:[%s2 + $0x50] sm:$0xff]
        %v293 = vld [vmem:[%s2 + $0x58] sm:$0xff]
        %v294 = vld [vmem:[%s2 + $0x60] sm:$0xff]
        %v295 = vld [vmem:[%s2 + $0x68] sm:$0xff]
        %v296 = vld [vmem:[%s2 + $0x70] sm:$0xff]
        %v297 = vld [vmem:[%s2 + $0x78] sm:$0xff]
        %v298 = vld [vmem:[%s2 + $0x80] sm:$0xff]
        %v299 = vld [vmem:[%s2 + $0x88] sm:$0xff]
        %v300 = vld [vmem:[%s2 + $0x90] sm:$0xff]
        %v301 = vld [vmem:[%s2 + $0x98] sm:$0xff]
        %v302 = vld [vmem:[%s3] sm:$0x1]
        %v304 = vlaneseq
        %v305 = vshrl.u32 %v304, 7
        %v306 = vsub.s32 0, %v305
        %v307 = vrot.slane %v302, %v306
        %vm309 = vcmask 261120
        %v311 = vsel %vm309, %v281, 0
        %313 = vmatprep.subr.mxu0 0.0
        %314 = vmatpush1.msra.mxu0 %v297
        %315 = vmatprep.subr.mxu0 0.0
        %316 = vmatpush1.msra.mxu0 %v296
        %317 = vmatprep.subr.mxu0 0.0
        %318 = vmatpush1.msra.mxu0 %v295
        %319 = vmatprep.subr.mxu0 0.0
        %320 = vmatpush1.msra.mxu0 %v294
        %321 = vmatprep.subr.mxu0 0.0
        %322 = vmatpush1.msra.mxu0 %v293
        %323 = vmatprep.subr.mxu0 0.0
        %324 = vmatpush1.msra.mxu0 %v292
        %325 = vmatprep.subr.mxu0 0.0
        %326 = vmatpush1.msra.mxu0 %v291
        %327 = vmatprep.subr.mxu0 0.0
        %328 = vmatpush1.msra.mxu0 %v290
        %329 = vmatprep.subr.mxu0 0.0
        %330 = vmatpush1.msra.mxu0 %v289
        %331 = vmatprep.subr.mxu0 0.0
        %332 = vmatpush1.msra.mxu0 %v288
        %333 = vmatprep.subr.mxu0 0.0
        %334 = vmatpush1.msra.mxu0 %v287
        %335 = vmatprep.subr.mxu0 0.0
        %336 = vmatpush1.msra.mxu0 %v286
        %337 = vmatprep.subr.mxu0 0.0
        %338 = vmatpush1.msra.mxu0 %v285
        %339 = vmatprep.subr.mxu0 0.0
        %340 = vmatpush1.msra.mxu0 %v284
        %341 = vmatprep.subr.mxu0 0.0
        %342 = vmatpush1.msra.mxu0 %v283
        %343 = vmatprep.subr.mxu0 0.0
        %344 = vmatpush1.msra.mxu0 %v282
        %345 = vmatprep.subr.mxu0 0.0
        %346 = vmatpush2.msra.mxu0 0.0
        %347 = vmatprep.subr.mxu0 0.0
        %348 = vmatpush2.msra.mxu0 0.0
        %349 = vmatprep.subr.mxu0 0.0
        %350 = vmatpush2.msra.mxu0 0.0
        %351 = vmatprep.subr.mxu0 0.0
        %352 = vmatpush2.msra.mxu0 0.0
        %353 = vmatprep.subr.mxu0 0.0
        %354 = vmatpush2.msra.mxu0 0.0
        %355 = vmatprep.subr.mxu0 0.0
        %356 = vmatpush2.msra.mxu0 0.0
        %357 = vmatprep.subr.mxu0 0.0
        %358 = vmatpush2.msra.mxu0 0.0
        %359 = vmatprep.subr.mxu0 0.0
        %360 = vmatpush2.msra.mxu0 0.0
        %361 = vmatprep.subr.mxu0 0.0
        %362 = vmatpush2.msra.mxu0 0.0
        %363 = vmatprep.subr.mxu0 0.0
        %364 = vmatpush2.msra.mxu0 0.0
        %365 = vmatprep.subr.mxu0 0.0
        %366 = vmatpush2.msra.mxu0 0.0
        %367 = vmatprep.subr.mxu0 0.0
        %368 = vmatpush2.msra.mxu0 0.0
        %369 = vmatprep.subr.mxu0 0.0
        %370 = vmatpush2.msra.mxu0 %v301
        %371 = vmatprep.subr.mxu0 0.0
        %372 = vmatpush2.msra.mxu0 %v300
        %373 = vmatprep.subr.mxu0 0.0
        %374 = vmatpush2.msra.mxu0 %v299
        %375 = vmatprep.subr.mxu0 0.0
        %376 = vmatpush2.msra.mxu0 %v298
        %377 = vmatprep.mubr.f32.mxu0 %v311
        %378 = vmatmul.mubr.f32.gmra.mxu0 %v280
        %v379 = vpop.f32.mrf.mxu0
        %v380 = vadd.f32 %v307, %v379
        %v381 = vpop.f32.mrf.mxu0
        %382 = vdwg.mxu0
        %v383 = vtanh.pop %v380
        %384 = vst.msk [vmem:[#allocation2] sm:$0xff] %vm309, %v383
        %v385 = vld [vmem:[%s4] sm:$0xff]
        %v386 = vld [vmem:[%s4 + $0x8] sm:$0xff]
        %v387 = vld [vmem:[%s4 + $0x10] sm:$0xff]
        %v388 = vld [vmem:[%s4 + $0x18] sm:$0xff]
        %v389 = vld [vmem:[%s5] sm:$0x1]
        %v391 = vlaneseq
        %v392 = vshrl.u32 %v391, 7
        %v393 = vsub.s32 0, %v392
        %v394 = vrot.slane %v389, %v393
        %v397 = vsel %vm309, %v383, 0
        %399 = vmatprep.subr.mxu0 0.0
        %400 = vmatpush1.msra.mxu0 0.0
        %401 = vmatprep.subr.mxu0 0.0
        %402 = vmatpush1.msra.mxu0 0.0
        %403 = vmatprep.subr.mxu0 0.0
        %404 = vmatpush1.msra.mxu0 0.0
        %405 = vmatprep.subr.mxu0 0.0
        %406 = vmatpush1.msra.mxu0 0.0
        %407 = vmatprep.subr.mxu0 0.0
        %408 = vmatpush1.msra.mxu0 0.0
        %409 = vmatprep.subr.mxu0 0.0
        %410 = vmatpush1.msra.mxu0 0.0
        %411 = vmatprep.subr.mxu0 0.0
        %412 = vmatpush1.msra.mxu0 0.0
        %413 = vmatprep.subr.mxu0 0.0
        %414 = vmatpush1.msra.mxu0 0.0
        %415 = vmatprep.subr.mxu0 0.0
        %416 = vmatpush1.msra.mxu0 0.0
        %417 = vmatprep.subr.mxu0 0.0
        %418 = vmatpush1.msra.mxu0 0.0
        %419 = vmatprep.subr.mxu0 0.0
        %420 = vmatpush1.msra.mxu0 0.0
        %421 = vmatprep.subr.mxu0 0.0
        %422 = vmatpush1.msra.mxu0 0.0
        %423 = vmatprep.subr.mxu0 0.0
        %424 = vmatpush1.msra.mxu0 %v388
        %425 = vmatprep.subr.mxu0 0.0
        %426 = vmatpush1.msra.mxu0 %v387
        %427 = vmatprep.subr.mxu0 0.0
        %428 = vmatpush1.msra.mxu0 %v386
        %429 = vmatprep.subr.mxu0 0.0
        %430 = vmatpush1.msra.mxu0 %v385
        %431 = vmatprep.subr.mxu0 0.0
        %432 = vmatpush2.msra.mxu0 0.0
        %433 = vmatprep.subr.mxu0 0.0
        %434 = vmatpush2.msra.mxu0 0.0
        %435 = vmatprep.subr.mxu0 0.0
        %436 = vmatpush2.msra.mxu0 0.0
        %437 = vmatprep.subr.mxu0 0.0
        %438 = vmatpush2.msra.mxu0 0.0
        %439 = vmatprep.subr.mxu0 0.0
        %440 = vmatpush2.msra.mxu0 0.0
        %441 = vmatprep.subr.mxu0 0.0
        %442 = vmatpush2.msra.mxu0 0.0
        %443 = vmatprep.subr.mxu0 0.0
        %444 = vmatpush2.msra.mxu0 0.0
        %445 = vmatprep.subr.mxu0 0.0
        %446 = vmatpush2.msra.mxu0 0.0
        %447 = vmatprep.subr.mxu0 0.0
        %448 = vmatpush2.msra.mxu0 0.0
        %449 = vmatprep.subr.mxu0 0.0
        %450 = vmatpush2.msra.mxu0 0.0
        %451 = vmatprep.subr.mxu0 0.0
        %452 = vmatpush2.msra.mxu0 0.0
        %453 = vmatprep.subr.mxu0 0.0
        %454 = vmatpush2.msra.mxu0 0.0
        %455 = vmatprep.subr.mxu0 0.0
        %456 = vmatpush2.msra.mxu0 0.0
        %457 = vmatprep.subr.mxu0 0.0
        %458 = vmatpush2.msra.mxu0 0.0
        %459 = vmatprep.subr.mxu0 0.0
        %460 = vmatpush2.msra.mxu0 0.0
        %461 = vmatprep.subr.mxu0 0.0
        %462 = vmatpush2.msra.mxu0 0.0
        %463 = vmatprep.mubr.f32.mxu0 0.0
        %464 = vmatmul.mubr.f32.gmra.mxu0 %v397
        %v465 = vpop.f32.mrf.mxu0
        %v466 = vadd.f32 %v394, %v465
        %v467 = vpop.f32.mrf.mxu0
        %468 = vdwg.mxu0
        %vm469 = vcmask 39936
        %470 = vst.msk [vmem:[%s272] sm:$0xff] %vm469, %v466
        %p471 = scmp.eq.s32.totalorder %s20, 11
        // Predicated region
        $region49: #{tpu_custom_call.1} parent=43 // pred_check
          %p472 = pneg %p471
        $region50: #{tpu_custom_call.1} parent=43 // pred_check_branch
          %474 = sbr.rel (%p472) target = $region52
        $region51: #{tpu_custom_call.1} parent=43 // pred_region
          %475 = vst.msk [vmem:[#allocation3] sm:$0xff] %vm309, %v383
        $region52: #{tpu_custom_call.1} parent=43 // pred_fallthru
          _
        %p476 = scmp.lt.s32.totalorder %s20, 11
        %s477 = scalar_select %p476, %s20, 11
        %s478 = smul.addr %s477, 8
        %s479 = scalar_lea.vmem %s6, %s478
        // Predicated region
        $region53: #{tpu_custom_call.1} parent=43 // pred_check
          %p480 = pneg %p169
        $region54: #{tpu_custom_call.1} parent=43 // pred_check_branch
          %482 = sbr.rel (%p480) target = $region56
        $region55: #{tpu_custom_call.1} parent=43 // pred_region
          _
        $region56: #{tpu_custom_call.1} parent=43 // pred_fallthru
          _
        // Predicated region
        $region57: #{tpu_custom_call.1} parent=43 // pred_check
          %p483 = pneg %p190
        $region58: #{tpu_custom_call.1} parent=43 // pred_check_branch
          %485 = sbr.rel (%p483) target = $region60
        $region59: #{tpu_custom_call.1} parent=43 // pred_region
          %s487 = ssub.s32 128, 128
          %488 = vsyncadd [#allocation4], %s487
          %s490 = sshll.u32 [#allocation3], 4
          %s491 = int_to_ptr.vmem [resolvable:$true] %s490
          %493 = dma.vmem_to_hbm [thread:$0]  %s491, 128, %s7, [#allocation4]
        $region60: #{tpu_custom_call.1} parent=43 // pred_fallthru
          _
        // Predicated region
        $region61: #{tpu_custom_call.1} parent=43 // pred_check
          %p494 = pneg %p190
        $region62: #{tpu_custom_call.1} parent=43 // pred_check_branch
          %496 = sbr.rel (%p494) target = $region64
        $region63: #{tpu_custom_call.1} parent=43 // pred_region
          %497 = dma.done [#allocation4], 128
        $region64: #{tpu_custom_call.1} parent=43 // pred_fallthru
          _
      $region44: #{tpu_custom_call.1} parent=5 // pred_fallthru
        _
      %p498 = scmp.le.s32.totalorder 2, %s15
      // Predicated region
      $region65: #{tpu_custom_call.1} parent=5 // pred_check
        %p499 = pneg %p498
      $region66: #{tpu_custom_call.1} parent=5 // pred_check_branch
        %501 = sbr.rel (%p499) target = $region68
      $region67: #{tpu_custom_call.1} parent=5 // pred_region
        %s502 = ssub.s32 %s15, 2
        // Predicated region
        $region69: #{tpu_custom_call.1} parent=67 // pred_check
          %p503 = pneg %p175
        $region70: #{tpu_custom_call.1} parent=67 // pred_check_branch
          %505 = sbr.rel (%p503) target = $region72
        $region71: #{tpu_custom_call.1} parent=67 // pred_region
          %p506 = scmp.lt.s32.totalorder %s21, 11
          %s507 = scalar_select %p506, %s21, 11
          %s508 = smul.addr %s507, 8
          %s509 = scalar_lea.vmem %s6, %s508
        $region72: #{tpu_custom_call.1} parent=67 // pred_fallthru
          _
      $region68: #{tpu_custom_call.1} parent=5 // pred_fallthru
        _
    $region6: #{tpu_custom_call.1} parent=1 // loop_footer
      %s19 = sadd.s32 1, %s15
    $region7: #{tpu_custom_call.1} parent=1 // loop_footer_branch
      %14 = sbr.rel target = $region3
    $region8: #{tpu_custom_call.1} parent=1 // loop_exit
      _
    %510 = vsyncpa [#allocation4], 1
    %s511 = scalar_lea.sflag [#allocation4], 1
    %512 = vsyncpa %s511, 1

</llo_original>
